<compile_context>
chip_gen: v7x
topology: tpu7x:2x2x1
jax: 0.10.0
libtpu: 0.0.40
codegen_flags: <defaults>
</compile_context>

<pallas_src>
import functools

import jax
import jax.numpy as jnp
import numpy as np
from jax.experimental import pallas as pl
from jax.experimental.pallas import tpu as pltpu

_SUBLANE = 8
_VMEM_BUDGET = 48 * 1024 * 1024   # conservative: safe on v5e/v6e/v7x


def _round_up(x, m):
    return ((x + m - 1) // m) * m


# ----------------------------------------------------------------------------
# Fused MLP kernel: chain of (matmul + bias [+ ReLU]) for one row tile.
# Intermediate activations never leave VMEM/vregs.
# ----------------------------------------------------------------------------
def _mlp_fused_kernel(x_ref, *refs, n_layers: int):
    # refs = (w0, b0, w1, b1, ..., w_{L-1}, b_{L-1}, o_ref)
    # x_ref: (TM, in_dim)   w_i: (K_i, N_i) full   b_i: (1, N_i)   o_ref: (TM, out_dim)
    o_ref = refs[-1]
    p = refs[:-1]
    h = x_ref[...].astype(jnp.float32)
    for i in range(n_layers):
        w = p[2 * i][...]                              # bf16 weights
        b = p[2 * i + 1][...].astype(jnp.float32)      # (1, N) broadcast over rows
        # bf16 operands -> MXU peak; accumulate in f32.
        h = jnp.dot(h.astype(w.dtype), w, preferred_element_type=jnp.float32) + b
        if i != n_layers - 1:
            h = jnp.maximum(h, 0.0)                    # ReLU on hidden layers only (f32)
    o_ref[...] = h.astype(o_ref.dtype)


# ----------------------------------------------------------------------------
# Tiling / VMEM helpers.
# ----------------------------------------------------------------------------
def _choose_tm(M, tm_max):
    """Row-tile size: big enough to amortize per-step cost, >=2 tiles when possible."""
    if M <= _SUBLANE:
        return M                      # single block equal to the full dim (legal)
    # Aim for at least 2 grid steps (v7x megacore) while staying under tm_max.
    return min(tm_max, _round_up(pl.cdiv(M, 2), _SUBLANE))


def _vmem_estimate(tm, in_dim, out_dim, layers, x_itemsize, out_itemsize):
    w_itemsize = jnp.dtype(layers[0][0].dtype).itemsize
    resident = sum(w.size + b.size for w, b in layers) * w_itemsize
    resident *= 2                                       # budget double-buffering
    stream = 2 * tm * (in_dim * x_itemsize + out_dim * out_itemsize)
    return resident + stream


# ----------------------------------------------------------------------------
# Wrapper: single fused pallas_call over a 1-D row grid.
# ----------------------------------------------------------------------------
def mlp_forward_pallas(x, params, *, tm_max=4096, compute_dtype=jnp.bfloat16):
    """Fused MLP forward. params = [(w, b), ...] with w as [in, out]."""
    M, in_dim = x.shape
    n_layers = len(params)
    out_dim = params[-1][0].shape[1]

    # bf16 weights/biases: MXU peak rate + halved weight HBM bytes. (In a real
    # model keep params stored in bf16 so this cast happens once, not per call.)
    layers = [(w.astype(compute_dtype), b.astype(compute_dtype).reshape(1, -1))
              for w, b in params]
    flat = []
    for w, b in layers:
        flat.append(w)
        flat.append(b)

    # --- row tiling: no wrapper-side jnp.pad; Pallas handles the ragged tail ---
    tm = _choose_tm(M, tm_max)
    while tm > _SUBLANE and _vmem_estimate(
            tm, in_dim, out_dim, layers, x.dtype.itemsize,
            x.dtype.itemsize) > _VMEM_BUDGET:
        tm = max(_SUBLANE, _round_up(tm // 2, _SUBLANE))
    # TODO(synk): if resident weights alone exceed the VMEM budget (dim >~ 2-3k),
    # fall back to tiling N (and K with a VMEM f32 accumulator + pl.when init).
    grid = (pl.cdiv(M, tm),)

    # --- specs: x streams over the grid; weights/biases resident (constant idx) ---
    in_specs = [pl.BlockSpec((tm, in_dim), lambda i: (i, 0))]
    for w, b in layers:
        in_specs.append(pl.BlockSpec(w.shape, lambda i: (0, 0)))
        in_specs.append(pl.BlockSpec(b.shape, lambda i: (0, 0)))
    # Unpadded (tm, out_dim) output block: full last dim is legal; 8x less HBM
    # write traffic than padding out_dim up to 128 lanes, and no wrapper slice.
    out_specs = pl.BlockSpec((tm, out_dim), lambda i: (i, 0))

    # --- advisory cost hint for the XLA scheduler ----------------------------
    flops = 0
    k = in_dim
    for w, _ in layers:
        n = w.shape[1]
        flops += 2 * M * k * n
        k = n
    bytes_accessed = x.size * x.dtype.itemsize + M * out_dim * x.dtype.itemsize
    bytes_accessed += sum(a.size * a.dtype.itemsize for a in flat)

    kernel = functools.partial(_mlp_fused_kernel, n_layers=n_layers)
    out = pl.pallas_call(
        kernel,
        out_shape=jax.ShapeDtypeStruct((M, out_dim), x.dtype),
        grid=grid,
        in_specs=in_specs,
        out_specs=out_specs,
        compiler_params=pltpu.CompilerParams(
            dimension_semantics=("parallel",),
            vmem_limit_bytes=_VMEM_BUDGET,
        ),
        cost_estimate=pl.CostEstimate(
            flops=int(flops), transcendentals=0,
            bytes_accessed=int(bytes_accessed)),
    )(x, *flat)

    return out


# ----------------------------------------------------------------------------
# Parameter init (deterministic, mimicking nn.Linear's uniform init).
# ----------------------------------------------------------------------------
def init_mlp_params(key, in_dim, dim, out_dim, n_hidden_layers=3,
                    dtype=jnp.float32):
    dims = [in_dim] + [dim] * n_hidden_layers + [out_dim]
    params = []
    for i in range(len(dims) - 1):
        fan_in, fan_out = dims[i], dims[i + 1]
        key, kw, kb = jax.random.split(key, 3)
        bound = 1.0 / np.sqrt(fan_in)
        w = jax.random.uniform(kw, (fan_in, fan_out), dtype,
                               minval=-bound, maxval=bound)   # [in, out]
        b = jax.random.uniform(kb, (fan_out,), dtype,
                               minval=-bound, maxval=bound)
        params.append((w, b))
    return params


def mlp_forward_ref(x, params):
    n_layers = len(params)
    for i, (w, b) in enumerate(params):
        x = x @ w + b
        if i != n_layers - 1:
            x = jnp.maximum(x, 0.0)
    return x


# ----------------------------------------------------------------------------
# Demo / correctness check
# ----------------------------------------------------------------------------
if __name__ == "__main__":
    key = jax.random.PRNGKey(0)
    k_x, k_p = jax.random.split(key)

    batch, in_dim, dim, out_dim = 8, 32, 128, 16

    x = jax.random.normal(k_x, (batch, in_dim), jnp.float32)
    params = init_mlp_params(k_p, in_dim, dim, out_dim, n_hidden_layers=3)

    out = mlp_forward_pallas(x, params)
    out = jax.block_until_ready(out)

    ref = mlp_forward_ref(x, params)   # f32 reference
    # bf16 matmul operands with f32 accumulation -> loosened tolerance.
    np.testing.assert_allclose(np.asarray(out), np.asarray(ref),
                               rtol=3e-2, atol=3e-2)

    print("KERNEL_OK")
</pallas_src>

<mosaic_0001>
module attributes {stable_mosaic.version = 11 : i64} {
  func.func @_mlp_fused_kernel(%arg0: i32, %arg1: memref<8x32xf32, #tpu.memory_space<vmem>>, %arg2: memref<32x128xbf16, #tpu.memory_space<vmem>>, %arg3: memref<1x128xbf16, #tpu.memory_space<vmem>>, %arg4: memref<128x128xbf16, #tpu.memory_space<vmem>>, %arg5: memref<1x128xbf16, #tpu.memory_space<vmem>>, %arg6: memref<128x128xbf16, #tpu.memory_space<vmem>>, %arg7: memref<1x128xbf16, #tpu.memory_space<vmem>>, %arg8: memref<128x16xbf16, #tpu.memory_space<vmem>>, %arg9: memref<1x16xbf16, #tpu.memory_space<vmem>>, %arg10: memref<8x16xf32, #tpu.memory_space<vmem>>) attributes {dimension_semantics = [#tpu.dimension_semantics<parallel>], iteration_bounds = array<i64: 1>, scalar_prefetch = 0 : i64, scratch_operands = 0 : i64, tpu.core_type = #tpu.core_type<tc>, window_params = [{transform_indices = @transform_0, window_bounds = array<i64: 8, 32>}, {pipeline_mode = #tpu.pipeline_mode<synchronous>, transform_indices = @transform_1, window_bounds = array<i64: 32, 128>}, {pipeline_mode = #tpu.pipeline_mode<synchronous>, transform_indices = @transform_2, window_bounds = array<i64: 1, 128>}, {pipeline_mode = #tpu.pipeline_mode<synchronous>, transform_indices = @transform_3, window_bounds = array<i64: 128, 128>}, {pipeline_mode = #tpu.pipeline_mode<synchronous>, transform_indices = @transform_4, window_bounds = array<i64: 1, 128>}, {pipeline_mode = #tpu.pipeline_mode<synchronous>, transform_indices = @transform_5, window_bounds = array<i64: 128, 128>}, {pipeline_mode = #tpu.pipeline_mode<synchronous>, transform_indices = @transform_6, window_bounds = array<i64: 1, 128>}, {pipeline_mode = #tpu.pipeline_mode<synchronous>, transform_indices = @transform_7, window_bounds = array<i64: 128, 16>}, {pipeline_mode = #tpu.pipeline_mode<synchronous>, transform_indices = @transform_8, window_bounds = array<i64: 1, 16>}, {transform_indices = @transform_9, window_bounds = array<i64: 8, 16>}]} {
    %c0 = arith.constant 0 : index
    %c0_0 = arith.constant 0 : index
    %0 = vector.load %arg1[%c0, %c0_0] : memref<8x32xf32, #tpu.memory_space<vmem>>, vector<8x32xf32>
    %c0_1 = arith.constant 0 : index
    %c0_2 = arith.constant 0 : index
    %1 = vector.load %arg2[%c0_1, %c0_2] : memref<32x128xbf16, #tpu.memory_space<vmem>>, vector<32x128xbf16>
    %c0_3 = arith.constant 0 : index
    %c0_4 = arith.constant 0 : index
    %2 = vector.load %arg3[%c0_3, %c0_4] : memref<1x128xbf16, #tpu.memory_space<vmem>>, vector<1x128xbf16>
    %3 = arith.extf %2 : vector<1x128xbf16> to vector<1x128xf32>
    %4 = arith.truncf %0 : vector<8x32xf32> to vector<8x32xbf16>
    %cst = arith.constant dense<0.000000e+00> : vector<8x128xf32>
    %5 = tpu.matmul %4, %1, %cst {dimension_numbers = #tpu.dot_dimension_numbers<[1], [0], [0], [1], [0, 0, 1, 1], [], []>} : vector<8x32xbf16>, vector<32x128xbf16>, vector<8x128xf32> -> vector<8x128xf32>
    %6 = vector.broadcast %3 : vector<1x128xf32> to vector<8x128xf32>
    %7 = arith.addf %5, %6 : vector<8x128xf32>
    %cst_5 = arith.constant 0.000000e+00 : f32
    %8 = vector.broadcast %cst_5 : f32 to vector<8x128xf32>
    %9 = arith.maximumf %7, %8 : vector<8x128xf32>
    %c0_6 = arith.constant 0 : index
    %c0_7 = arith.constant 0 : index
    %10 = vector.load %arg4[%c0_6, %c0_7] : memref<128x128xbf16, #tpu.memory_space<vmem>>, vector<128x128xbf16>
    %c0_8 = arith.constant 0 : index
    %c0_9 = arith.constant 0 : index
    %11 = vector.load %arg5[%c0_8, %c0_9] : memref<1x128xbf16, #tpu.memory_space<vmem>>, vector<1x128xbf16>
    %12 = arith.extf %11 : vector<1x128xbf16> to vector<1x128xf32>
    %13 = arith.truncf %9 : vector<8x128xf32> to vector<8x128xbf16>
    %cst_10 = arith.constant dense<0.000000e+00> : vector<8x128xf32>
    %14 = tpu.matmul %13, %10, %cst_10 {dimension_numbers = #tpu.dot_dimension_numbers<[1], [0], [0], [1], [0, 0, 1, 1], [], []>} : vector<8x128xbf16>, vector<128x128xbf16>, vector<8x128xf32> -> vector<8x128xf32>
    %15 = vector.broadcast %12 : vector<1x128xf32> to vector<8x128xf32>
    %16 = arith.addf %14, %15 : vector<8x128xf32>
    %cst_11 = arith.constant 0.000000e+00 : f32
    %17 = vector.broadcast %cst_11 : f32 to vector<8x128xf32>
    %18 = arith.maximumf %16, %17 : vector<8x128xf32>
    %c0_12 = arith.constant 0 : index
    %c0_13 = arith.constant 0 : index
    %19 = vector.load %arg6[%c0_12, %c0_13] : memref<128x128xbf16, #tpu.memory_space<vmem>>, vector<128x128xbf16>
    %c0_14 = arith.constant 0 : index
    %c0_15 = arith.constant 0 : index
    %20 = vector.load %arg7[%c0_14, %c0_15] : memref<1x128xbf16, #tpu.memory_space<vmem>>, vector<1x128xbf16>
    %21 = arith.extf %20 : vector<1x128xbf16> to vector<1x128xf32>
    %22 = arith.truncf %18 : vector<8x128xf32> to vector<8x128xbf16>
    %cst_16 = arith.constant dense<0.000000e+00> : vector<8x128xf32>
    %23 = tpu.matmul %22, %19, %cst_16 {dimension_numbers = #tpu.dot_dimension_numbers<[1], [0], [0], [1], [0, 0, 1, 1], [], []>} : vector<8x128xbf16>, vector<128x128xbf16>, vector<8x128xf32> -> vector<8x128xf32>
    %24 = vector.broadcast %21 : vector<1x128xf32> to vector<8x128xf32>
    %25 = arith.addf %23, %24 : vector<8x128xf32>
    %cst_17 = arith.constant 0.000000e+00 : f32
    %26 = vector.broadcast %cst_17 : f32 to vector<8x128xf32>
    %27 = arith.maximumf %25, %26 : vector<8x128xf32>
    %c0_18 = arith.constant 0 : index
    %c0_19 = arith.constant 0 : index
    %28 = vector.load %arg8[%c0_18, %c0_19] : memref<128x16xbf16, #tpu.memory_space<vmem>>, vector<128x16xbf16>
    %c0_20 = arith.constant 0 : index
    %c0_21 = arith.constant 0 : index
    %29 = vector.load %arg9[%c0_20, %c0_21] : memref<1x16xbf16, #tpu.memory_space<vmem>>, vector<1x16xbf16>
    %30 = arith.extf %29 : vector<1x16xbf16> to vector<1x16xf32>
    %31 = arith.truncf %27 : vector<8x128xf32> to vector<8x128xbf16>
    %cst_22 = arith.constant dense<0.000000e+00> : vector<8x16xf32>
    %32 = tpu.matmul %31, %28, %cst_22 {dimension_numbers = #tpu.dot_dimension_numbers<[1], [0], [0], [1], [0, 0, 1, 1], [], []>} : vector<8x128xbf16>, vector<128x16xbf16>, vector<8x16xf32> -> vector<8x16xf32>
    %33 = vector.broadcast %30 : vector<1x16xf32> to vector<8x16xf32>
    %34 = arith.addf %32, %33 : vector<8x16xf32>
    %c0_23 = arith.constant 0 : index
    %c0_24 = arith.constant 0 : index
    %35 = vector.load %arg10[%c0_23, %c0_24] : memref<8x16xf32, #tpu.memory_space<vmem>>, vector<8x16xf32>
    tpu.vector_store %arg10[%c0_23, %c0_24], %34 {strides = array<i32>} : memref<8x16xf32, #tpu.memory_space<vmem>>, vector<8x16xf32>,
    return
  }
  func.func @transform_0(%arg0: i32) -> (i32, i32) {
    %c0_i32 = arith.constant 0 : i32
    %c0_i32_0 = arith.constant 0 : i32
    return %arg0, %c0_i32 : i32, i32
  }
  func.func @transform_1(%arg0: i32) -> (i32, i32) {
    %c0_i32 = arith.constant 0 : i32
    %c0_i32_0 = arith.constant 0 : i32
    %c0_i32_1 = arith.constant 0 : i32
    return %c0_i32, %c0_i32_0 : i32, i32
  }
  func.func @transform_2(%arg0: i32) -> (i32, i32) {
    %c0_i32 = arith.constant 0 : i32
    %c0_i32_0 = arith.constant 0 : i32
    %c0_i32_1 = arith.constant 0 : i32
    return %c0_i32, %c0_i32_0 : i32, i32
  }
  func.func @transform_3(%arg0: i32) -> (i32, i32) {
    %c0_i32 = arith.constant 0 : i32
    %c0_i32_0 = arith.constant 0 : i32
    %c0_i32_1 = arith.constant 0 : i32
    return %c0_i32, %c0_i32_0 : i32, i32
  }
  func.func @transform_4(%arg0: i32) -> (i32, i32) {
    %c0_i32 = arith.constant 0 : i32
    %c0_i32_0 = arith.constant 0 : i32
    %c0_i32_1 = arith.constant 0 : i32
    return %c0_i32, %c0_i32_0 : i32, i32
  }
  func.func @transform_5(%arg0: i32) -> (i32, i32) {
    %c0_i32 = arith.constant 0 : i32
    %c0_i32_0 = arith.constant 0 : i32
    %c0_i32_1 = arith.constant 0 : i32
    return %c0_i32, %c0_i32_0 : i32, i32
  }
  func.func @transform_6(%arg0: i32) -> (i32, i32) {
    %c0_i32 = arith.constant 0 : i32
    %c0_i32_0 = arith.constant 0 : i32
    %c0_i32_1 = arith.constant 0 : i32
    return %c0_i32, %c0_i32_0 : i32, i32
  }
  func.func @transform_7(%arg0: i32) -> (i32, i32) {
    %c0_i32 = arith.constant 0 : i32
    %c0_i32_0 = arith.constant 0 : i32
    %c0_i32_1 = arith.constant 0 : i32
    return %c0_i32, %c0_i32_0 : i32, i32
  }
  func.func @transform_8(%arg0: i32) -> (i32, i32) {
    %c0_i32 = arith.constant 0 : i32
    %c0_i32_0 = arith.constant 0 : i32
    %c0_i32_1 = arith.constant 0 : i32
    return %c0_i32, %c0_i32_0 : i32, i32
  }
  func.func @transform_9(%arg0: i32) -> (i32, i32) {
    %c0_i32 = arith.constant 0 : i32
    %c0_i32_0 = arith.constant 0 : i32
    return %arg0, %c0_i32 : i32, i32
  }
}

</mosaic_0001>

<llo_original>
// kernel: tpu_custom_call.1
$region0: #{tpu_custom_call.1}
  #allocation0 [shape = 'u32[]', space=smem, size = 0x4, offset = 0x4, fixed_abs, tag = 'smem constant byte address 0x4 - core index']
  #allocation1 [shape = 'u32[144,128]{1,0:T(1,128)}', space=vmem, size = 0x12000, scoped, tag = 'internal scratch']
  %s0 = inlined_call_operand.hbm [shape: f32[8,32], index: 0, kind: input, shape index: {}]
  %s1 = inlined_call_operand.vmem [shape: bf16[32,128], index: 1, kind: input, shape index: {}]
  %s2 = inlined_call_operand.vmem [shape: bf16[1,128], index: 2, kind: input, shape index: {}]
  %s3 = inlined_call_operand.vmem [shape: bf16[128,128], index: 3, kind: input, shape index: {}]
  %s4 = inlined_call_operand.vmem [shape: bf16[1,128], index: 4, kind: input, shape index: {}]
  %s5 = inlined_call_operand.hbm [shape: bf16[128,128], index: 5, kind: input, shape index: {}]
  %s6 = inlined_call_operand.vmem [shape: bf16[1,128], index: 6, kind: input, shape index: {}]
  %s7 = inlined_call_operand.vmem [shape: bf16[128,16], index: 7, kind: input, shape index: {}]
  %s8 = inlined_call_operand.vmem [shape: bf16[1,16], index: 8, kind: input, shape index: {}]
  %s9 = inlined_call_operand.hbm [shape: f32[8,16], index: 9, kind: output, shape index: {}]
  %s10 = sld [smem:[#allocation0]]
  $region54: #{tpu_custom_call.1} parent=0
    _
  %s12 = ssub.s32 1, %s10
  %s13 = scalar_select 0, %s12, %s10
  $region1: #{tpu_custom_call.1} parent=0
    #allocation2 [shape = 'u8[4096]{0}', space=vmem, size = 0x1000, scoped, tag = 'input window, operand 0, single buffered']
    #allocation3 [shape = 's32[1]{0}', space=sflag, size = 0x4, scoped, tag = 'scoped memory for tpu_custom_call.1']
    #allocation4 [shape = 's32[1]{0}', space=sflag, size = 0x4, scoped, tag = 'scoped memory for tpu_custom_call.1']
    #allocation5 [shape = 'u8[32768]{0}', space=vmem, size = 0x8000, scoped, tag = 'input window, operand 5, single buffered']
    #allocation6 [shape = 's32[1]{0}', space=sflag, size = 0x4, scoped, tag = 'scoped memory for tpu_custom_call.1']
    #allocation7 [shape = 'u8[4096]{0}', space=vmem, size = 0x1000, scoped, tag = 'output window, operand 0, single buffered']
    %14 = vsyncpa [#allocation3], 0
    %15 = vsyncpa [#allocation6], 0
    %16 = vsyncpa [#allocation4], 0
    // Predicated region
    $region2: #{tpu_custom_call.1} parent=1 // pred_check
      _
    $region3: #{tpu_custom_call.1} parent=1 // pred_check_branch
      %18 = sbr.rel (0) target = $region5
    $region4: #{tpu_custom_call.1} parent=1 // pred_region
      %s20 = ssub.s32 128, 128
      %21 = vsyncadd [#allocation3], %s20
      %s23 = sshll.u32 [#allocation2], 4
      %s24 = int_to_ptr.vmem [resolvable:$true] %s23
      %26 = dma.hbm_to_vmem [thread:$0]  %s0, 128, %s24, [#allocation3]
    $region5: #{tpu_custom_call.1} parent=1 // pred_fallthru
      _
    // Predicated region
    $region6: #{tpu_custom_call.1} parent=1 // pred_check
      _
    $region7: #{tpu_custom_call.1} parent=1 // pred_check_branch
      %28 = sbr.rel (0) target = $region9
    $region8: #{tpu_custom_call.1} parent=1 // pred_region
      _
    $region9: #{tpu_custom_call.1} parent=1 // pred_fallthru
      _
    // Predicated region
    $region10: #{tpu_custom_call.1} parent=1 // pred_check
      _
    $region11: #{tpu_custom_call.1} parent=1 // pred_check_branch
      %30 = sbr.rel (0) target = $region13
    $region12: #{tpu_custom_call.1} parent=1 // pred_region
      _
    $region13: #{tpu_custom_call.1} parent=1 // pred_fallthru
      _
    // Predicated region
    $region14: #{tpu_custom_call.1} parent=1 // pred_check
      _
    $region15: #{tpu_custom_call.1} parent=1 // pred_check_branch
      %32 = sbr.rel (0) target = $region17
    $region16: #{tpu_custom_call.1} parent=1 // pred_region
      _
    $region17: #{tpu_custom_call.1} parent=1 // pred_fallthru
      _
    // Predicated region
    $region18: #{tpu_custom_call.1} parent=1 // pred_check
      _
    $region19: #{tpu_custom_call.1} parent=1 // pred_check_branch
      %34 = sbr.rel (0) target = $region21
    $region20: #{tpu_custom_call.1} parent=1 // pred_region
      _
    $region21: #{tpu_custom_call.1} parent=1 // pred_fallthru
      _
    // Predicated region
    $region22: #{tpu_custom_call.1} parent=1 // pred_check
      _
    $region23: #{tpu_custom_call.1} parent=1 // pred_check_branch
      %36 = sbr.rel (0) target = $region25
    $region24: #{tpu_custom_call.1} parent=1 // pred_region
      %s38 = ssub.s32 1024, 1024
      %39 = vsyncadd [#allocation6], %s38
      %s40 = sshll.u32 [#allocation5], 4
      %s41 = int_to_ptr.vmem [resolvable:$true] %s40
      %46 = dma.hbm_to_vmem [thread:$0]  %s5, 1024, %s41, [#allocation6], 64, 64, 4
    $region25: #{tpu_custom_call.1} parent=1 // pred_fallthru
      _
    // Predicated region
    $region26: #{tpu_custom_call.1} parent=1 // pred_check
      _
    $region27: #{tpu_custom_call.1} parent=1 // pred_check_branch
      %48 = sbr.rel (0) target = $region29
    $region28: #{tpu_custom_call.1} parent=1 // pred_region
      _
    $region29: #{tpu_custom_call.1} parent=1 // pred_fallthru
      _
    // Predicated region
    $region30: #{tpu_custom_call.1} parent=1 // pred_check
      _
    $region31: #{tpu_custom_call.1} parent=1 // pred_check_branch
      %50 = sbr.rel (0) target = $region33
    $region32: #{tpu_custom_call.1} parent=1 // pred_region
      _
    $region33: #{tpu_custom_call.1} parent=1 // pred_fallthru
      _
    // Predicated region
    $region34: #{tpu_custom_call.1} parent=1 // pred_check
      _
    $region35: #{tpu_custom_call.1} parent=1 // pred_check_branch
      %52 = sbr.rel (0) target = $region37
    $region36: #{tpu_custom_call.1} parent=1 // pred_region
      _
    $region37: #{tpu_custom_call.1} parent=1 // pred_fallthru
      _
    // Predicated region
    $region38: #{tpu_custom_call.1} parent=1 // pred_check
      _
    $region39: #{tpu_custom_call.1} parent=1 // pred_check_branch
      %54 = sbr.rel (0) target = $region41
    $region40: #{tpu_custom_call.1} parent=1 // pred_region
      %55 = dma.done [#allocation3], 128
    $region41: #{tpu_custom_call.1} parent=1 // pred_fallthru
      _
    // Predicated region
    $region42: #{tpu_custom_call.1} parent=1 // pred_check
      _
    $region43: #{tpu_custom_call.1} parent=1 // pred_check_branch
      %57 = sbr.rel (0) target = $region45
    $region44: #{tpu_custom_call.1} parent=1 // pred_region
      %58 = dma.done [#allocation6], 1024
    $region45: #{tpu_custom_call.1} parent=1 // pred_fallthru
      _
    %v60 = vld [vmem:[#allocation2] sm:$0xff]
    %v61 = vld [vmem:[%s1] sm:$0xf]
    %v62 = vld [vmem:[%s1 + $0x4] sm:$0xf]
    %v63 = vld [vmem:[%s1 + $0x8] sm:$0xf]
    %v64 = vld [vmem:[%s1 + $0xc] sm:$0xf]
    %v65 = vld [vmem:[%s2] sm:$0x1]
    %v66 = vunpack.c.l.bf16 %v65
    %v67 = vpack.c.bf16 %v60, %v60
    %v68 = vlaneseq
    %v69 = vshrl.u32 %v68, 7
    %v70 = vsub.s32 0, %v69
    %v71 = vrot.slane %v66, %v70
    %v76 = vunpack.c.l.b16 %v61
    %v77 = vunpack.c.l.b16 %v62
    %v78 = vunpack.c.l.b16 %v63
    %v79 = vunpack.c.l.b16 %v64
    %v80 = vpack.c.b16 %v77, %v76
    %v81 = vpack.c.b16 %v79, %v78
    %vm84 = vcmask 261120
    %v86 = vsel %vm84, %v67, 0
    %88 = vmatprep.subr.bf16.mxu0 0
    %89 = vmatpush1.bf16.msra.mxu0 %v80
    %90 = vmatprep.subr.bf16.mxu0 0
    %91 = vmatpush1.bf16.msra.mxu0 %v81
    %92 = vmatprep.subr.bf16.mxu0 0
    %93 = vmatpush1.bf16.msra.mxu0 0
    %94 = vmatprep.subr.bf16.mxu0 0
    %95 = vmatpush1.bf16.msra.mxu0 0
    %96 = vmatprep.subr.bf16.mxu0 0
    %97 = vmatpush1.bf16.msra.mxu0 0
    %98 = vmatprep.subr.bf16.mxu0 0
    %99 = vmatpush1.bf16.msra.mxu0 0
    %100 = vmatprep.subr.bf16.mxu0 0
    %101 = vmatpush1.bf16.msra.mxu0 0
    %102 = vmatprep.subr.bf16.mxu0 0
    %103 = vmatpush1.bf16.msra.mxu0 0
    %104 = vmatprep.subr.bf16.mxu0 0
    %105 = vmatpush1.bf16.msra.mxu0 0
    %106 = vmatprep.subr.bf16.mxu0 0
    %107 = vmatpush1.bf16.msra.mxu0 0
    %108 = vmatprep.subr.bf16.mxu0 0
    %109 = vmatpush1.bf16.msra.mxu0 0
    %110 = vmatprep.subr.bf16.mxu0 0
    %111 = vmatpush1.bf16.msra.mxu0 0
    %112 = vmatprep.subr.bf16.mxu0 0
    %113 = vmatpush1.bf16.msra.mxu0 0
    %114 = vmatprep.subr.bf16.mxu0 0
    %115 = vmatpush1.bf16.msra.mxu0 0
    %116 = vmatprep.subr.bf16.mxu0 0
    %117 = vmatpush1.bf16.msra.mxu0 0
    %118 = vmatprep.subr.bf16.mxu0 0
    %119 = vmatpush1.bf16.msra.mxu0 0
    %120 = vmatprep.mubr.bf16.mxu0 0
    %121 = vmatmul.mubr.bf16.gmra.mrb[0].mxu0 %v86
    %v122 = vpop.f32.mrb[0].mxu0
    %v123 = vadd.f32 %v71, %v122
    %v124 = vpop.f32.mrb[0].mxu0
    %v125 = vpop.f32.mrb[0].mxu0
    %v126 = vpop.f32.mrb[0].mxu0
    %127 = vdwg.mxu0
    %v128 = vmax.f32 %v123, 0.0
    %v129 = vld [vmem:[%s3] sm:$0xf]
    %v130 = vld [vmem:[%s3 + $0x4] sm:$0xf]
    %v131 = vld [vmem:[%s3 + $0x8] sm:$0xf]
    %v132 = vld [vmem:[%s3 + $0xc] sm:$0xf]
    %v133 = vld [vmem:[%s3 + $0x10] sm:$0xf]
    %v134 = vld [vmem:[%s3 + $0x14] sm:$0xf]
    %v135 = vld [vmem:[%s3 + $0x18] sm:$0xf]
    %v136 = vld [vmem:[%s3 + $0x1c] sm:$0xf]
    %v137 = vld [vmem:[%s3 + $0x20] sm:$0xf]
    %v138 = vld [vmem:[%s3 + $0x24] sm:$0xf]
    %v139 = vld [vmem:[%s3 + $0x28] sm:$0xf]
    %v140 = vld [vmem:[%s3 + $0x2c] sm:$0xf]
    %v141 = vld [vmem:[%s3 + $0x30] sm:$0xf]
    %v142 = vld [vmem:[%s3 + $0x34] sm:$0xf]
    %v143 = vld [vmem:[%s3 + $0x38] sm:$0xf]
    %v144 = vld [vmem:[%s3 + $0x3c] sm:$0xf]
    %v145 = vld [vmem:[%s4] sm:$0x1]
    %v146 = vunpack.c.l.bf16 %v145
    %v147 = vpack.c.bf16 %v128, %v128
    %v148 = vlaneseq
    %v149 = vshrl.u32 %v148, 7
    %v150 = vsub.s32 0, %v149
    %v151 = vrot.slane %v146, %v150
    %v168 = vunpack.c.l.b16 %v129
    %v169 = vunpack.c.l.b16 %v130
    %v170 = vunpack.c.l.b16 %v131
    %v171 = vunpack.c.l.b16 %v132
    %v172 = vunpack.c.l.b16 %v133
    %v173 = vunpack.c.l.b16 %v134
    %v174 = vunpack.c.l.b16 %v135
    %v175 = vunpack.c.l.b16 %v136
    %v176 = vunpack.c.l.b16 %v137
    %v177 = vunpack.c.l.b16 %v138
    %v178 = vunpack.c.l.b16 %v139
    %v179 = vunpack.c.l.b16 %v140
    %v180 = vunpack.c.l.b16 %v141
    %v181 = vunpack.c.l.b16 %v142
    %v182 = vunpack.c.l.b16 %v143
    %v183 = vunpack.c.l.b16 %v144
    %v184 = vpack.c.b16 %v169, %v168
    %v185 = vpack.c.b16 %v171, %v170
    %v186 = vpack.c.b16 %v173, %v172
    %v187 = vpack.c.b16 %v175, %v174
    %v188 = vpack.c.b16 %v177, %v176
    %v189 = vpack.c.b16 %v179, %v178
    %v190 = vpack.c.b16 %v181, %v180
    %v191 = vpack.c.b16 %v183, %v182
    %200 = vmatprep.subr.bf16.mxu0 0
    %201 = vmatpush1.bf16.msra.mxu0 %v184
    %202 = vmatprep.subr.bf16.mxu0 0
    %203 = vmatpush1.bf16.msra.mxu0 %v185
    %204 = vmatprep.subr.bf16.mxu0 0
    %205 = vmatpush1.bf16.msra.mxu0 %v186
    %206 = vmatprep.subr.bf16.mxu0 0
    %207 = vmatpush1.bf16.msra.mxu0 %v187
    %208 = vmatprep.subr.bf16.mxu0 0
    %209 = vmatpush1.bf16.msra.mxu0 %v188
    %210 = vmatprep.subr.bf16.mxu0 0
    %211 = vmatpush1.bf16.msra.mxu0 %v189
    %212 = vmatprep.subr.bf16.mxu0 0
    %213 = vmatpush1.bf16.msra.mxu0 %v190
    %214 = vmatprep.subr.bf16.mxu0 0
    %215 = vmatpush1.bf16.msra.mxu0 %v191
    %216 = vmatprep.subr.bf16.mxu0 0
    %217 = vmatpush1.bf16.msra.mxu0 0
    %218 = vmatprep.subr.bf16.mxu0 0
    %219 = vmatpush1.bf16.msra.mxu0 0
    %220 = vmatprep.subr.bf16.mxu0 0
    %221 = vmatpush1.bf16.msra.mxu0 0
    %222 = vmatprep.subr.bf16.mxu0 0
    %223 = vmatpush1.bf16.msra.mxu0 0
    %224 = vmatprep.subr.bf16.mxu0 0
    %225 = vmatpush1.bf16.msra.mxu0 0
    %226 = vmatprep.subr.bf16.mxu0 0
    %227 = vmatpush1.bf16.msra.mxu0 0
    %228 = vmatprep.subr.bf16.mxu0 0
    %229 = vmatpush1.bf16.msra.mxu0 0
    %230 = vmatprep.subr.bf16.mxu0 0
    %231 = vmatpush1.bf16.msra.mxu0 0
    %232 = vmatprep.mubr.bf16.mxu0 0
    %233 = vmatmul.mubr.bf16.gmra.mrb[0].mxu0 %v147
    %v234 = vpop.f32.mrb[0].mxu0
    %v235 = vadd.f32 %v151, %v234
    %v236 = vpop.f32.mrb[0].mxu0
    %v237 = vpop.f32.mrb[0].mxu0
    %v238 = vpop.f32.mrb[0].mxu0
    %239 = vdwg.mxu0
    %v240 = vmax.f32 %v235, 0.0
    %v241 = vld [vmem:[#allocation5] sm:$0xf]
    %v242 = vld [vmem:[#allocation5 + $0x4] sm:$0xf]
    %v243 = vld [vmem:[#allocation5 + $0x8] sm:$0xf]
    %v244 = vld [vmem:[#allocation5 + $0xc] sm:$0xf]
    %v245 = vld [vmem:[#allocation5 + $0x10] sm:$0xf]
    %v246 = vld [vmem:[#allocation5 + $0x14] sm:$0xf]
    %v247 = vld [vmem:[#allocation5 + $0x18] sm:$0xf]
    %v248 = vld [vmem:[#allocation5 + $0x1c] sm:$0xf]
    %v249 = vld [vmem:[#allocation5 + $0x20] sm:$0xf]
    %v250 = vld [vmem:[#allocation5 + $0x24] sm:$0xf]
    %v251 = vld [vmem:[#allocation5 + $0x28] sm:$0xf]
    %v252 = vld [vmem:[#allocation5 + $0x2c] sm:$0xf]
    %v253 = vld [vmem:[#allocation5 + $0x30] sm:$0xf]
    %v254 = vld [vmem:[#allocation5 + $0x34] sm:$0xf]
    %v255 = vld [vmem:[#allocation5 + $0x38] sm:$0xf]
    %v256 = vld [vmem:[#allocation5 + $0x3c] sm:$0xf]
    %v257 = vld [vmem:[%s6] sm:$0x1]
    %v258 = vunpack.c.l.bf16 %v257
    %v259 = vpack.c.bf16 %v240, %v240
    %v260 = vlaneseq
    %v261 = vshrl.u32 %v260, 7
    %v262 = vsub.s32 0, %v261
    %v263 = vrot.slane %v258, %v262
    %v280 = vunpack.c.l.b16 %v241
    %v281 = vunpack.c.l.b16 %v242
    %v282 = vunpack.c.l.b16 %v243
    %v283 = vunpack.c.l.b16 %v244
    %v284 = vunpack.c.l.b16 %v245
    %v285 = vunpack.c.l.b16 %v246
    %v286 = vunpack.c.l.b16 %v247
    %v287 = vunpack.c.l.b16 %v248
    %v288 = vunpack.c.l.b16 %v249
    %v289 = vunpack.c.l.b16 %v250
    %v290 = vunpack.c.l.b16 %v251
    %v291 = vunpack.c.l.b16 %v252
    %v292 = vunpack.c.l.b16 %v253
    %v293 = vunpack.c.l.b16 %v254
    %v294 = vunpack.c.l.b16 %v255
    %v295 = vunpack.c.l.b16 %v256
    %v296 = vpack.c.b16 %v281, %v280
    %v297 = vpack.c.b16 %v283, %v282
    %v298 = vpack.c.b16 %v285, %v284
    %v299 = vpack.c.b16 %v287, %v286
    %v300 = vpack.c.b16 %v289, %v288
    %v301 = vpack.c.b16 %v291, %v290
    %v302 = vpack.c.b16 %v293, %v292
    %v303 = vpack.c.b16 %v295, %v294
    %312 = vmatprep.subr.bf16.mxu0 0
    %313 = vmatpush1.bf16.msra.mxu0 %v296
    %314 = vmatprep.subr.bf16.mxu0 0
    %315 = vmatpush1.bf16.msra.mxu0 %v297
    %316 = vmatprep.subr.bf16.mxu0 0
    %317 = vmatpush1.bf16.msra.mxu0 %v298
    %318 = vmatprep.subr.bf16.mxu0 0
    %319 = vmatpush1.bf16.msra.mxu0 %v299
    %320 = vmatprep.subr.bf16.mxu0 0
    %321 = vmatpush1.bf16.msra.mxu0 %v300
    %322 = vmatprep.subr.bf16.mxu0 0
    %323 = vmatpush1.bf16.msra.mxu0 %v301
    %324 = vmatprep.subr.bf16.mxu0 0
    %325 = vmatpush1.bf16.msra.mxu0 %v302
    %326 = vmatprep.subr.bf16.mxu0 0
    %327 = vmatpush1.bf16.msra.mxu0 %v303
    %328 = vmatprep.subr.bf16.mxu0 0
    %329 = vmatpush1.bf16.msra.mxu0 0
    %330 = vmatprep.subr.bf16.mxu0 0
    %331 = vmatpush1.bf16.msra.mxu0 0
    %332 = vmatprep.subr.bf16.mxu0 0
    %333 = vmatpush1.bf16.msra.mxu0 0
    %334 = vmatprep.subr.bf16.mxu0 0
    %335 = vmatpush1.bf16.msra.mxu0 0
    %336 = vmatprep.subr.bf16.mxu0 0
    %337 = vmatpush1.bf16.msra.mxu0 0
    %338 = vmatprep.subr.bf16.mxu0 0
    %339 = vmatpush1.bf16.msra.mxu0 0
    %340 = vmatprep.subr.bf16.mxu0 0
    %341 = vmatpush1.bf16.msra.mxu0 0
    %342 = vmatprep.subr.bf16.mxu0 0
    %343 = vmatpush1.bf16.msra.mxu0 0
    %344 = vmatprep.mubr.bf16.mxu0 0
    %345 = vmatmul.mubr.bf16.gmra.mrb[0].mxu0 %v259
    %v346 = vpop.f32.mrb[0].mxu0
    %v347 = vadd.f32 %v263, %v346
    %v348 = vpop.f32.mrb[0].mxu0
    %v349 = vpop.f32.mrb[0].mxu0
    %v350 = vpop.f32.mrb[0].mxu0
    %351 = vdwg.mxu0
    %v352 = vmax.f32 %v347, 0.0
    %v353 = vld [vmem:[%s7] sm:$0xf]
    %v354 = vld [vmem:[%s7 + $0x4] sm:$0xf]
    %v355 = vld [vmem:[%s7 + $0x8] sm:$0xf]
    %v356 = vld [vmem:[%s7 + $0xc] sm:$0xf]
    %v357 = vld [vmem:[%s7 + $0x10] sm:$0xf]
    %v358 = vld [vmem:[%s7 + $0x14] sm:$0xf]
    %v359 = vld [vmem:[%s7 + $0x18] sm:$0xf]
    %v360 = vld [vmem:[%s7 + $0x1c] sm:$0xf]
    %v361 = vld [vmem:[%s7 + $0x20] sm:$0xf]
    %v362 = vld [vmem:[%s7 + $0x24] sm:$0xf]
    %v363 = vld [vmem:[%s7 + $0x28] sm:$0xf]
    %v364 = vld [vmem:[%s7 + $0x2c] sm:$0xf]
    %v365 = vld [vmem:[%s7 + $0x30] sm:$0xf]
    %v366 = vld [vmem:[%s7 + $0x34] sm:$0xf]
    %v367 = vld [vmem:[%s7 + $0x38] sm:$0xf]
    %v368 = vld [vmem:[%s7 + $0x3c] sm:$0xf]
    %v369 = vld [vmem:[%s8] sm:$0x1]
    %v370 = vunpack.c.l.bf16 %v369
    %v371 = vpack.c.bf16 %v352, %v352
    %v372 = vlaneseq
    %v373 = vshrl.u32 %v372, 7
    %v374 = vsub.s32 0, %v373
    %v375 = vrot.slane %v370, %v374
    %v392 = vunpack.c.l.b16 %v353
    %v393 = vunpack.c.l.b16 %v354
    %v394 = vunpack.c.l.b16 %v355
    %v395 = vunpack.c.l.b16 %v356
    %v396 = vunpack.c.l.b16 %v357
    %v397 = vunpack.c.l.b16 %v358
    %v398 = vunpack.c.l.b16 %v359
    %v399 = vunpack.c.l.b16 %v360
    %v400 = vunpack.c.l.b16 %v361
    %v401 = vunpack.c.l.b16 %v362
    %v402 = vunpack.c.l.b16 %v363
    %v403 = vunpack.c.l.b16 %v364
    %v404 = vunpack.c.l.b16 %v365
    %v405 = vunpack.c.l.b16 %v366
    %v406 = vunpack.c.l.b16 %v367
    %v407 = vunpack.c.l.b16 %v368
    %v408 = vpack.c.b16 %v393, %v392
    %v409 = vpack.c.b16 %v395, %v394
    %v410 = vpack.c.b16 %v397, %v396
    %v411 = vpack.c.b16 %v399, %v398
    %v412 = vpack.c.b16 %v401, %v400
    %v413 = vpack.c.b16 %v403, %v402
    %v414 = vpack.c.b16 %v405, %v404
    %v415 = vpack.c.b16 %v407, %v406
    %424 = vmatprep.subr.bf16.mxu0 0
    %425 = vmatpush1.bf16.msra.mxu0 %v408
    %426 = vmatprep.subr.bf16.mxu0 0
    %427 = vmatpush1.bf16.msra.mxu0 %v409
    %428 = vmatprep.subr.bf16.mxu0 0
    %429 = vmatpush1.bf16.msra.mxu0 %v410
    %430 = vmatprep.subr.bf16.mxu0 0
    %431 = vmatpush1.bf16.msra.mxu0 %v411
    %432 = vmatprep.subr.bf16.mxu0 0
    %433 = vmatpush1.bf16.msra.mxu0 %v412
    %434 = vmatprep.subr.bf16.mxu0 0
    %435 = vmatpush1.bf16.msra.mxu0 %v413
    %436 = vmatprep.subr.bf16.mxu0 0
    %437 = vmatpush1.bf16.msra.mxu0 %v414
    %438 = vmatprep.subr.bf16.mxu0 0
    %439 = vmatpush1.bf16.msra.mxu0 %v415
    %440 = vmatprep.subr.bf16.mxu0 0
    %441 = vmatpush1.bf16.msra.mxu0 0
    %442 = vmatprep.subr.bf16.mxu0 0
    %443 = vmatpush1.bf16.msra.mxu0 0
    %444 = vmatprep.subr.bf16.mxu0 0
    %445 = vmatpush1.bf16.msra.mxu0 0
    %446 = vmatprep.subr.bf16.mxu0 0
    %447 = vmatpush1.bf16.msra.mxu0 0
    %448 = vmatprep.subr.bf16.mxu0 0
    %449 = vmatpush1.bf16.msra.mxu0 0
    %450 = vmatprep.subr.bf16.mxu0 0
    %451 = vmatpush1.bf16.msra.mxu0 0
    %452 = vmatprep.subr.bf16.mxu0 0
    %453 = vmatpush1.bf16.msra.mxu0 0
    %454 = vmatprep.subr.bf16.mxu0 0
    %455 = vmatpush1.bf16.msra.mxu0 0
    %456 = vmatprep.mubr.bf16.mxu0 0
    %457 = vmatmul.mubr.bf16.gmra.mrb[0].mxu0 %v371
    %v458 = vpop.f32.mrb[0].mxu0
    %v459 = vadd.f32 %v375, %v458
    %v460 = vpop.f32.mrb[0].mxu0
    %v461 = vpop.f32.mrb[0].mxu0
    %v462 = vpop.f32.mrb[0].mxu0
    %463 = vdwg.mxu0
    %vm464 = vcmask 130048
    %465 = vst.msk [vmem:[#allocation7] sm:$0xff] %vm464, %v459
    // Predicated region
    $region46: #{tpu_custom_call.1} parent=1 // pred_check
      _
    $region47: #{tpu_custom_call.1} parent=1 // pred_check_branch
      %467 = sbr.rel (0) target = $region49
    $region48: #{tpu_custom_call.1} parent=1 // pred_region
      %s469 = ssub.s32 128, 128
      %470 = vsyncadd [#allocation4], %s469
      %s472 = sshll.u32 [#allocation7], 4
      %s473 = int_to_ptr.vmem [resolvable:$true] %s472
      %475 = dma.vmem_to_hbm [thread:$0]  %s473, 128, %s9, [#allocation4]
    $region49: #{tpu_custom_call.1} parent=1 // pred_fallthru
      _
    // Predicated region
    $region50: #{tpu_custom_call.1} parent=1 // pred_check
      _
    $region51: #{tpu_custom_call.1} parent=1 // pred_check_branch
      %477 = sbr.rel (0) target = $region53
    $region52: #{tpu_custom_call.1} parent=1 // pred_region
      %478 = dma.done [#allocation4], 128
    $region53: #{tpu_custom_call.1} parent=1 // pred_fallthru
      _
    %479 = vsyncpa [#allocation3], 1
    %480 = vsyncpa [#allocation6], 1
    %481 = vsyncpa [#allocation4], 1

</llo_original>
